<compile_context>
chip_gen: v5e
topology: v5e:2x2
jax: 0.10.0
libtpu: 0.0.40
codegen_flags: <defaults>
</compile_context>

<pallas_src>
import jax
import jax.numpy as jnp
from jax.experimental import pallas as pl
from jax.experimental.pallas import tpu as pltpu

LANE = 128           # lane width of a vreg
MAX_ROW_TILE = 4096  # rows-of-128 per grid step (4096*128*4B = 2 MiB tile)


def linmod_kernel(x_ref, params_ref, o_ref):
    # x_ref : (TR, 128) VMEM tile of lane-packed inputs.
    # params_ref : (2,) SMEM vector = [weight, bias].
    w = params_ref[0]
    b = params_ref[1]
    # VPU fused multiply-add; the scalars broadcast straight into the vector op.
    o_ref[...] = x_ref[...] * w + b


def linmod_forward(x, weight, bias):
    """nn.Linear(1, 1) forward: y = x @ W^T + b.

    x: (N, 1) f32, weight: (1, 1) f32, bias: (1,) f32  ->  (N, 1) f32.
    """
    n, f_in = x.shape
    f_out = weight.shape[0]
    assert f_in == 1 and f_out == 1, "LinMod is nn.Linear(1, 1)"

    # --- Lane-dense repack: (N, 1) -> (rows, 128), batch axis on lanes. -----
    rows = pl.cdiv(n, LANE)
    n_lanes = rows * LANE
    xf = x.reshape(-1)
    if n_lanes != n:                       # skip the pad copy when aligned
        xf = jnp.pad(xf, (0, n_lanes - n))
    x2d = xf.reshape(rows, LANE)

    # --- Row-tile selection. ------------------------------------------------
    if rows <= 16:
        # Single grid step; block shape equals the full (rows, 128) array.
        tr = rows
    else:
        # >=2 grid steps (v7x megacore), tile a multiple of 8 sublanes,
        # capped at 4096 rows (2 MiB) to fit scoped VMEM on all generations.
        half = pl.cdiv(pl.cdiv(rows, 2), 8) * 8
        tr = min(MAX_ROW_TILE, half)
    rows_pad = pl.cdiv(rows, tr) * tr
    if rows_pad != rows:                   # skip the row-pad copy when aligned
        x2d = jnp.pad(x2d, ((0, rows_pad - rows), (0, 0)))
    grid = (rows_pad // tr,)

    # --- Parameters: single (2,) SMEM vector [w, b]. -------------------------
    params = jnp.concatenate([weight.reshape(-1), bias.reshape(-1)]).astype(x.dtype)

    out = pl.pallas_call(
        linmod_kernel,
        out_shape=jax.ShapeDtypeStruct((rows_pad, LANE), x.dtype),
        grid=grid,
        in_specs=[
            pl.BlockSpec((tr, LANE), lambda i: (i, 0)),          # x tile (VMEM)
            pl.BlockSpec(memory_space=pltpu.MemorySpace.SMEM),   # [w, b] scalars
        ],
        out_specs=pl.BlockSpec((tr, LANE), lambda i: (i, 0)),
        compiler_params=pltpu.CompilerParams(
            dimension_semantics=("parallel",),   # megacore-shardable on v7x
            allow_input_fusion=[True, False],    # fold pad/reshape into x DMA
        ),
    )(x2d, params)

    # --- Undo the lane packing / padding only where actually needed. --------
    if rows_pad == rows and n_lanes == n:
        return out.reshape(n, f_out)
    return out.reshape(-1)[:n].reshape(n, f_out)


if __name__ == "__main__":
    # Same data as the reference script (23 samples, 1 feature).
    x = jnp.array(
        [12.4, 14.3, 14.5, 14.9, 16.1, 16.9, 16.5, 15.4, 17.0, 17.9, 18.8,
         20.3, 22.4, 19.4, 15.5, 16.7, 17.3, 18.4, 19.2, 17.4, 19.5, 19.7,
         21.2],
        dtype=jnp.float32,
    ).reshape(-1, 1)

    # Deterministic parameter init (shapes from nn.Linear(1, 1)).
    key = jax.random.PRNGKey(0)
    k_w, k_b = jax.random.split(key)
    weight = jax.random.uniform(k_w, (1, 1), jnp.float32, minval=-1.0, maxval=1.0)
    bias = jax.random.uniform(k_b, (1,), jnp.float32, minval=-1.0, maxval=1.0)

    y = linmod_forward(x, weight, bias)
    jax.block_until_ready(y)

    # Sanity check against plain JAX reference (nn.Linear semantics).
    y_ref = x @ weight.T + bias
    assert y.shape == (23, 1)
    assert jnp.allclose(y, y_ref, atol=1e-5), "mismatch vs reference"

    # Also exercise a lane-aligned, multi-step-grid shape (no pad/slice path,
    # >= 2 grid steps so the v7x megacore path is covered).
    k_big = jax.random.PRNGKey(1)
    x_big = jax.random.normal(k_big, (8192, 1), jnp.float32)
    y_big = linmod_forward(x_big, weight, bias)
    jax.block_until_ready(y_big)
    assert jnp.allclose(y_big, x_big @ weight.T + bias, atol=1e-5)

    print("KERNEL_OK")
</pallas_src>

<mosaic_0001>
module attributes {stable_mosaic.version = 11 : i64} {
  func.func @linmod_kernel(%arg0: i32, %arg1: memref<1x128xf32, #tpu.memory_space<vmem>>, %arg2: memref<2xf32, #tpu.memory_space<smem>>, %arg3: memref<1x128xf32, #tpu.memory_space<vmem>>) attributes {dimension_semantics = [#tpu.dimension_semantics<parallel>], iteration_bounds = array<i64: 1>, scalar_prefetch = 0 : i64, scratch_operands = 0 : i64, tpu.core_type = #tpu.core_type<tc>, window_params = [{transform_indices = @transform_0, window_bounds = array<i64: 1, 128>}, {transform_indices = @transform_1, window_bounds = array<i64: 2>}, {transform_indices = @transform_2, window_bounds = array<i64: 1, 128>}]} {
    %c0 = arith.constant 0 : index
    %0 = memref.load %arg2[%c0] : memref<2xf32, #tpu.memory_space<smem>>
    %c1 = arith.constant 1 : index
    %1 = memref.load %arg2[%c1] : memref<2xf32, #tpu.memory_space<smem>>
    %c0_0 = arith.constant 0 : index
    %c0_1 = arith.constant 0 : index
    %2 = vector.load %arg1[%c0_0, %c0_1] : memref<1x128xf32, #tpu.memory_space<vmem>>, vector<1x128xf32>
    %3 = vector.broadcast %0 : f32 to vector<1x128xf32>
    %4 = arith.mulf %2, %3 : vector<1x128xf32>
    %5 = vector.broadcast %1 : f32 to vector<1x128xf32>
    %6 = arith.addf %4, %5 : vector<1x128xf32>
    %c0_2 = arith.constant 0 : index
    %c0_3 = arith.constant 0 : index
    %7 = vector.load %arg3[%c0_2, %c0_3] : memref<1x128xf32, #tpu.memory_space<vmem>>, vector<1x128xf32>
    tpu.vector_store %arg3[%c0_2, %c0_3], %6 {strides = array<i32>} : memref<1x128xf32, #tpu.memory_space<vmem>>, vector<1x128xf32>,
    return
  }
  func.func @transform_0(%arg0: i32) -> (i32, i32) {
    %c0_i32 = arith.constant 0 : i32
    %c0_i32_0 = arith.constant 0 : i32
    return %arg0, %c0_i32 : i32, i32
  }
  func.func @transform_1(%arg0: i32) -> i32 {
    %c0_i32 = arith.constant 0 : i32
    %c0_i32_0 = arith.constant 0 : i32
    return %c0_i32 : i32
  }
  func.func @transform_2(%arg0: i32) -> (i32, i32) {
    %c0_i32 = arith.constant 0 : i32
    %c0_i32_0 = arith.constant 0 : i32
    return %arg0, %c0_i32 : i32, i32
  }
}

</mosaic_0001>

<llo_original>
// kernel: tpu_custom_call.1
$region0: #{tpu_custom_call.1}
  #allocation0 [shape = 'u32[]', space=smem, size = 0x4, offset = 0x4, fixed_abs, tag = 'smem constant byte address 0x4 - core index']
  #allocation1 [shape = 'u32[72,128]{1,0:T(1,128)}', space=vmem, size = 0x9000, scoped, tag = 'internal scratch']
  %s0 = inlined_call_operand.hbm [shape: f32[1,128], index: 0, kind: input, shape index: {}]
  %s1 = inlined_call_operand.hbm [shape: f32[2], index: 1, kind: input, shape index: {}]
  %s2 = inlined_call_operand.hbm [shape: f32[1,128], index: 2, kind: output, shape index: {}]
  %s3 = sld [smem:[#allocation0]]
  $region26: #{tpu_custom_call.1} parent=0
    _
  %s5 = ssub.s32 1, %s3
  %s6 = scalar_select 0, %s5, %s3
  $region1: #{tpu_custom_call.1} parent=0
    #allocation2 [shape = 'u8[512]{0}', space=vmem, size = 0x400, scoped, tag = 'input window, operand 0, single buffered']
    #allocation3 [shape = 's32[1]{0}', space=sflag, size = 0x4, scoped, tag = 'scoped memory for tpu_custom_call.1']
    #allocation4 [shape = 's32[1]{0}', space=sflag, size = 0x4, scoped, tag = 'scoped memory for tpu_custom_call.1']
    #allocation5 [shape = 's32[1]{0}', space=sflag, size = 0x4, scoped, tag = 'scoped memory for tpu_custom_call.1']
    #allocation6 [shape = 'u8[512]{0}', space=smem, size = 0x200, scoped, tag = 'input window, operand 1, single buffered']
    #allocation7 [shape = 'u8[512]{0}', space=vmem, size = 0x400, scoped, tag = 'output window, operand 0, single buffered']
    %7 = vsyncpa [#allocation3], 0
    %8 = vsyncpa [#allocation5], 0
    %9 = vsyncpa [#allocation4], 0
    // Predicated region
    $region2: #{tpu_custom_call.1} parent=1 // pred_check
      _
    $region3: #{tpu_custom_call.1} parent=1 // pred_check_branch
      %11 = sbr.rel (0) target = $region5
    $region4: #{tpu_custom_call.1} parent=1 // pred_region
      %13 = vsyncadd [#allocation3], 0
      %s15 = sshll.u32 %s0, 4
      %s16 = int_to_ptr.hbm [resolvable:$true] %s15
      %s17 = sshll.u32 [#allocation2], 4
      %s18 = int_to_ptr.vmem [resolvable:$true] %s17
      %20 = dma.hbm_to_vmem [thread:$0]  %s16, 16, %s18, [#allocation3]
    $region5: #{tpu_custom_call.1} parent=1 // pred_fallthru
      _
    // Predicated region
    $region6: #{tpu_custom_call.1} parent=1 // pred_check
      _
    $region7: #{tpu_custom_call.1} parent=1 // pred_check_branch
      %22 = sbr.rel (0) target = $region9
    $region8: #{tpu_custom_call.1} parent=1 // pred_region
      %24 = vsyncadd [#allocation5], 0
      %s26 = sshll.u32 %s1, 4
      %s27 = int_to_ptr.hbm [resolvable:$true] %s26
      %29 = dma.hbm_to_smem %s27, 16, [#allocation6], [#allocation5]
    $region9: #{tpu_custom_call.1} parent=1 // pred_fallthru
      _
    // Predicated region
    $region10: #{tpu_custom_call.1} parent=1 // pred_check
      _
    $region11: #{tpu_custom_call.1} parent=1 // pred_check_branch
      %31 = sbr.rel (0) target = $region13
    $region12: #{tpu_custom_call.1} parent=1 // pred_region
      %33 = dma.done [#allocation3], 16
    $region13: #{tpu_custom_call.1} parent=1 // pred_fallthru
      _
    // Predicated region
    $region14: #{tpu_custom_call.1} parent=1 // pred_check
      _
    $region15: #{tpu_custom_call.1} parent=1 // pred_check_branch
      %35 = sbr.rel (0) target = $region17
    $region16: #{tpu_custom_call.1} parent=1 // pred_region
      %37 = dma.done [#allocation5], 16
    $region17: #{tpu_custom_call.1} parent=1 // pred_fallthru
      _
    %38 = sfence
    %s39 = sld [smem:[#allocation6]]
    %s40 = sld [smem:[#allocation6 + $0x1]]
    %v41 = vld [vmem:[#allocation2] sm:$0x1]
    %v42 = vstv %s39
    %v43 = vmul.f32 %v41, %v42
    %v44 = vstv %s40
    %v45 = vadd.f32 %v43, %v44
    %46 = vst [vmem:[#allocation7] sm:$0x1] %v45
    // Predicated region
    $region18: #{tpu_custom_call.1} parent=1 // pred_check
      _
    $region19: #{tpu_custom_call.1} parent=1 // pred_check_branch
      %48 = sbr.rel (0) target = $region21
    $region20: #{tpu_custom_call.1} parent=1 // pred_region
      %50 = vsyncadd [#allocation4], 0
      %s52 = sshll.u32 [#allocation7], 4
      %s53 = int_to_ptr.vmem [resolvable:$true] %s52
      %s54 = sshll.u32 %s2, 4
      %s55 = int_to_ptr.hbm [resolvable:$true] %s54
      %57 = dma.vmem_to_hbm [thread:$0]  %s53, 16, %s55, [#allocation4]
    $region21: #{tpu_custom_call.1} parent=1 // pred_fallthru
      _
    // Predicated region
    $region22: #{tpu_custom_call.1} parent=1 // pred_check
      _
    $region23: #{tpu_custom_call.1} parent=1 // pred_check_branch
      %59 = sbr.rel (0) target = $region25
    $region24: #{tpu_custom_call.1} parent=1 // pred_region
      %61 = dma.done [#allocation4], 16
    $region25: #{tpu_custom_call.1} parent=1 // pred_fallthru
      _
    %62 = vsyncpa [#allocation3], 1
    %63 = vsyncpa [#allocation4], 1
    %64 = vsyncpa [#allocation5], 1

</llo_original>
